<compile_context>
chip_gen: v5e
topology: v5e:2x2
jax: 0.10.0
libtpu: 0.0.40
codegen_flags: <defaults>
</compile_context>

<pallas_src>
import functools

import jax
import jax.numpy as jnp
from jax import lax
from jax.experimental import pallas as pl
from jax.experimental.pallas import tpu as pltpu

_LANE = 128
_SUBLANE = 8
# Statically unroll the hidden-layer loop up to this depth; beyond it use a
# lax.fori_loop with a dynamic index into the stacked weights.
_MAX_UNROLL = 4


def _round_up(n, m):
    return ((n + m - 1) // m) * m


def _make_mlp_kernel(num_hidden):
    """Kernel closure over the (static) number of hidden->hidden layers."""

    def kernel(*refs):
        if num_hidden > 0:
            xtc_ref, w1_ref, b1_ref, wh_ref, bh_ref, w3_ref, b3_ref, out_ref = refs
        else:
            xtc_ref, w1_ref, b1_ref, w3_ref, b3_ref, out_ref = refs

        def dot(a, w):
            # Cast the activation to the weight dtype (bf16 weights -> bf16
            # MXU matmul); accumulate in f32.  Bias/ReLU stay f32 (v5e VPU).
            return jnp.dot(a.astype(w.dtype), w,
                           preferred_element_type=jnp.float32)

        # Layer 1: one MXU dot on the concatenated [x | t | context] tile.
        h = jnp.maximum(dot(xtc_ref[...], w1_ref[...]) + b1_ref[...], 0.0)

        # Hidden layers.
        if num_hidden > 0:
            if num_hidden <= _MAX_UNROLL:
                for l in range(num_hidden):
                    h = jnp.maximum(dot(h, wh_ref[l]) + bh_ref[l], 0.0)
            else:
                def body(l, hh):
                    return jnp.maximum(dot(hh, wh_ref[l]) + bh_ref[l], 0.0)
                h = lax.fori_loop(0, num_hidden, body, h)

        # Output layer (no activation); narrow (TB, out_dim) store.
        out_ref[...] = (dot(h, w3_ref[...]) + b3_ref[...]).astype(out_ref.dtype)

    return kernel


def prepare_params(params, weight_dtype=jnp.bfloat16):
    """One-time weight prep (outside the per-call forward path):
      * transpose PyTorch (out,in) Linear weights to (in,out),
      * zero-pad the hidden feature dim to a multiple of 128 lanes
        (numerically inert: padded bias is 0, ReLU(0)=0, padded rows of the
        next weight are 0),
      * cast weights to `weight_dtype` (bf16 default: MXU-native on v6e/v7x,
        halves resident VMEM / DMA); biases stay f32.
    Returns a dict of arrays ONLY (safe to pass through jax.jit)."""
    (w1, b1), *hidden, (w3, b3) = params
    in_dim = w1.shape[1]
    H = w1.shape[0]
    out_dim = w3.shape[0]
    H_pad = _round_up(H, _LANE)

    def pad2(a, rows, cols, dtype):
        a = jnp.pad(a, ((0, rows - a.shape[0]), (0, cols - a.shape[1])))
        return a.astype(dtype)

    w1p = pad2(w1.T, in_dim, H_pad, weight_dtype)
    b1p = pad2(b1.reshape(1, -1), 1, H_pad, jnp.float32)
    wh = (jnp.stack([pad2(w.T, H_pad, H_pad, weight_dtype) for w, _ in hidden])
          if hidden else None)
    bh = (jnp.stack([pad2(b.reshape(1, -1), 1, H_pad, jnp.float32)
                     for _, b in hidden])
          if hidden else None)
    w3p = pad2(w3.T, H_pad, out_dim, weight_dtype)    # output dim NOT padded
    b3p = b3.reshape(1, -1).astype(jnp.float32)
    return dict(w1=w1p, b1=b1p, wh=wh, bh=bh, w3=w3p, b3=b3p)


def _resident_spec(shape):
    """BlockSpec for an operand that never changes across the batch grid.
    Single-buffered (pl.Buffered(1)) so the weight stack is not pointlessly
    double-buffered -- halves its VMEM footprint (critical on v7x's 64 MiB)."""
    nd = len(shape)
    index_map = lambda i, _nd=nd: (0,) * _nd
    if hasattr(pl, "Buffered"):
        return pl.BlockSpec(shape, index_map, pipeline_mode=pl.Buffered(1))
    return pl.BlockSpec(shape, index_map)


@functools.partial(jax.jit, static_argnames=("max_tb",))
def mlp_forward(x, t, context, prepped, *, max_tb=256):
    """x: (B, x_dim), t: (B,) or (B,1), context: (B, ctx_dim)."""
    B = x.shape[0]
    # Cheap wrapper concat; feeds layer 1 as a single (TB, in_dim) MXU tile.
    xtc = jnp.concatenate(
        [x, t.reshape(B, 1).astype(x.dtype), context.astype(x.dtype)], axis=-1)
    in_dim = xtc.shape[1]

    w1, b1 = prepped["w1"], prepped["b1"]
    wh, bh = prepped["wh"], prepped["bh"]
    w3, b3 = prepped["w3"], prepped["b3"]
    H_pad = w1.shape[1]
    out_dim = w3.shape[1]
    num_hidden = 0 if wh is None else wh.shape[0]

    # Balanced batch tiling: ntiles tiles of TB rows (TB multiple of 8
    # sublanes).  At least 2 tiles (when B allows) so the "parallel" axis can
    # be sharded across v7x's 2 TensorCores; the extra grid step costs only
    # ~0.35us on single-TC v5e/v6e.  Sweep max_tb (128-512 for f32 on v5e,
    # up to 1024 on v6e at large B).
    ntiles = max(pl.cdiv(B, max_tb), 2) if B >= 2 * _SUBLANE else 1
    TB = _round_up(pl.cdiv(B, ntiles), _SUBLANE)
    B_pad = ntiles * TB
    if B_pad != B:
        xtc = jnp.pad(xtc, ((0, B_pad - B), (0, 0)))

    in_specs = [pl.BlockSpec((TB, in_dim), lambda i: (i, 0)),
                _resident_spec((in_dim, H_pad)),
                _resident_spec((1, H_pad))]
    args = [xtc, w1, b1]
    if num_hidden:
        in_specs += [_resident_spec((num_hidden, H_pad, H_pad)),
                     _resident_spec((num_hidden, 1, H_pad))]
        args += [wh, bh]
    in_specs += [_resident_spec((H_pad, out_dim)),
                 _resident_spec((1, out_dim))]
    args += [w3, b3]

    # Advisory cost estimate for XLA's scheduler (free win when this MLP sits
    # inside a larger diffusion step).
    flops = 2 * B_pad * (in_dim * H_pad + num_hidden * H_pad * H_pad
                         + H_pad * out_dim)
    bytes_accessed = (xtc.size * xtc.dtype.itemsize
                      + B_pad * out_dim * x.dtype.itemsize
                      + sum(a.size * a.dtype.itemsize for a in args[1:]))

    out = pl.pallas_call(
        _make_mlp_kernel(num_hidden),
        out_shape=jax.ShapeDtypeStruct((B_pad, out_dim), x.dtype),
        grid=(ntiles,),
        in_specs=in_specs,
        out_specs=pl.BlockSpec((TB, out_dim), lambda i: (i, 0)),
        compiler_params=pltpu.CompilerParams(
            dimension_semantics=("parallel",),
            # <= ~48 MiB: safe under v7x's 64 MiB physical VMEM, and plenty of
            # headroom on v5e/v6e's 128 MiB.
            vmem_limit_bytes=48 * 1024 * 1024),
        cost_estimate=pl.CostEstimate(flops=flops, transcendentals=0,
                                      bytes_accessed=bytes_accessed),
    )(*args)

    return out[:B] if B_pad != B else out


def init_params(key, input_dim, output_dim, hidden_size=64, num_layers=2):
    """Deterministic synthetic init matching PyTorch Linear shapes (out, in)."""
    dims = [input_dim] + [hidden_size] * num_layers + [output_dim]
    params = []
    for i in range(len(dims) - 1):
        key, kw, kb = jax.random.split(key, 3)
        fan_in, fan_out = dims[i], dims[i + 1]
        bound = 1.0 / jnp.sqrt(fan_in)
        w = jax.random.uniform(kw, (fan_out, fan_in), jnp.float32, -bound, bound)
        b = jax.random.uniform(kb, (fan_out,), jnp.float32, -bound, bound)
        params.append((w, b))
    return params


def _reference(params, x, t, context):
    """Pure-JAX reference (original PyTorch semantics)."""
    B = x.shape[0]
    h = jnp.concatenate([x, t.reshape(B, 1), context], axis=-1)
    for i, (w, b) in enumerate(params):
        h = h @ w.T + b
        if i < len(params) - 1:
            h = jnp.maximum(h, 0.0)
    return h


if __name__ == "__main__":
    key = jax.random.PRNGKey(0)

    # ---- Config 1: small shapes matching the module defaults --------------
    B, x_dim, ctx_dim = 8, 4, 3
    hidden_size, num_layers, output_dim = 32, 2, 4
    input_dim = x_dim + 1 + ctx_dim          # x + t + context concatenated

    kx, kt, kc, kp = jax.random.split(key, 4)
    x = jax.random.normal(kx, (B, x_dim), jnp.float32)
    t = jax.random.normal(kt, (B,), jnp.float32)
    context = jax.random.normal(kc, (B, ctx_dim), jnp.float32)
    params = init_params(kp, input_dim, output_dim, hidden_size, num_layers)
    ref = _reference(params, x, t, context)

    # Exact-semantics run with f32 weights.  Tolerance covers TPU matmul
    # precision-mode differences (XLA's default f32 matmul is bf16-pass based,
    # so reference and kernel may legitimately differ at the ~1e-3 level).
    out = mlp_forward(x, t, context, prepare_params(params, jnp.float32))
    jax.block_until_ready(out)
    assert out.shape == (B, output_dim)
    assert jnp.allclose(out, ref, atol=2e-2, rtol=2e-2), \
        float(jnp.max(jnp.abs(out - ref)))

    # bf16-weight path (the v6e/v7x default): f32 accumulation, looser tol.
    out_bf16 = mlp_forward(x, t, context, prepare_params(params))
    jax.block_until_ready(out_bf16)
    assert out_bf16.shape == (B, output_dim)
    assert jnp.allclose(out_bf16, ref, atol=6e-2, rtol=6e-2), \
        float(jnp.max(jnp.abs(out_bf16 - ref)))

    # ---- Config 2: deeper net -> exercises the fori_loop hidden-layer path,
    # batch padding, and the multi-tile (2-TC-shardable) grid. ---------------
    B2, num_layers2, hidden2, out_dim2 = 20, 7, 64, 5
    k2x, k2t, k2c, k2p = jax.random.split(jax.random.PRNGKey(1), 4)
    x2 = jax.random.normal(k2x, (B2, x_dim), jnp.float32)
    t2 = jax.random.normal(k2t, (B2,), jnp.float32)
    c2 = jax.random.normal(k2c, (B2, ctx_dim), jnp.float32)
    params2 = init_params(k2p, input_dim, out_dim2, hidden2, num_layers2)
    ref2 = _reference(params2, x2, t2, c2)
    out2 = mlp_forward(x2, t2, c2, prepare_params(params2, jnp.float32))
    jax.block_until_ready(out2)
    assert out2.shape == (B2, out_dim2)
    assert jnp.allclose(out2, ref2, atol=2e-2, rtol=2e-2), \
        float(jnp.max(jnp.abs(out2 - ref2)))

    print("KERNEL_OK")
</pallas_src>

<mosaic_0001>
module attributes {stable_mosaic.version = 11 : i64} {
  func.func @kernel(%arg0: i32, %arg1: memref<8x8xf32, #tpu.memory_space<vmem>>, %arg2: memref<8x128xf32, #tpu.memory_space<vmem>>, %arg3: memref<1x128xf32, #tpu.memory_space<vmem>>, %arg4: memref<1x128x128xf32, #tpu.memory_space<vmem>>, %arg5: memref<1x1x128xf32, #tpu.memory_space<vmem>>, %arg6: memref<128x4xf32, #tpu.memory_space<vmem>>, %arg7: memref<1x4xf32, #tpu.memory_space<vmem>>, %arg8: memref<8x4xf32, #tpu.memory_space<vmem>>) attributes {dimension_semantics = [#tpu.dimension_semantics<parallel>], iteration_bounds = array<i64: 1>, scalar_prefetch = 0 : i64, scratch_operands = 0 : i64, tpu.core_type = #tpu.core_type<tc>, window_params = [{transform_indices = @transform_0, window_bounds = array<i64: 8, 8>}, {pipeline_mode = #tpu.pipeline_mode<synchronous>, transform_indices = @transform_1, window_bounds = array<i64: 8, 128>}, {pipeline_mode = #tpu.pipeline_mode<synchronous>, transform_indices = @transform_2, window_bounds = array<i64: 1, 128>}, {pipeline_mode = #tpu.pipeline_mode<synchronous>, transform_indices = @transform_3, window_bounds = array<i64: 1, 128, 128>}, {pipeline_mode = #tpu.pipeline_mode<synchronous>, transform_indices = @transform_4, window_bounds = array<i64: 1, 1, 128>}, {pipeline_mode = #tpu.pipeline_mode<synchronous>, transform_indices = @transform_5, window_bounds = array<i64: 128, 4>}, {pipeline_mode = #tpu.pipeline_mode<synchronous>, transform_indices = @transform_6, window_bounds = array<i64: 1, 4>}, {transform_indices = @transform_7, window_bounds = array<i64: 8, 4>}]} {
    %c0 = arith.constant 0 : index
    %c0_0 = arith.constant 0 : index
    %0 = vector.load %arg1[%c0, %c0_0] : memref<8x8xf32, #tpu.memory_space<vmem>>, vector<8x8xf32>
    %c0_1 = arith.constant 0 : index
    %c0_2 = arith.constant 0 : index
    %1 = vector.load %arg2[%c0_1, %c0_2] : memref<8x128xf32, #tpu.memory_space<vmem>>, vector<8x128xf32>
    %cst = arith.constant dense<0.000000e+00> : vector<8x128xf32>
    %2 = tpu.matmul %0, %1, %cst {dimension_numbers = #tpu.dot_dimension_numbers<[1], [0], [0], [1], [0, 0, 1, 1], [], []>} : vector<8x8xf32>, vector<8x128xf32>, vector<8x128xf32> -> vector<8x128xf32>
    %c0_3 = arith.constant 0 : index
    %c0_4 = arith.constant 0 : index
    %3 = vector.load %arg3[%c0_3, %c0_4] : memref<1x128xf32, #tpu.memory_space<vmem>>, vector<1x128xf32>
    %4 = vector.broadcast %3 : vector<1x128xf32> to vector<8x128xf32>
    %5 = arith.addf %2, %4 : vector<8x128xf32>
    %cst_5 = arith.constant 0.000000e+00 : f32
    %6 = vector.broadcast %cst_5 : f32 to vector<8x128xf32>
    %7 = arith.maximumf %5, %6 : vector<8x128xf32>
    %c0_6 = arith.constant 0 : index
    %c0_7 = arith.constant 0 : index
    %c0_8 = arith.constant 0 : index
    %8 = vector.load %arg4[%c0_6, %c0_7, %c0_8] : memref<1x128x128xf32, #tpu.memory_space<vmem>>, vector<1x128x128xf32>
    %9 = vector.shape_cast %8 : vector<1x128x128xf32> to vector<128x128xf32>
    %cst_9 = arith.constant dense<0.000000e+00> : vector<8x128xf32>
    %10 = tpu.matmul %7, %9, %cst_9 {dimension_numbers = #tpu.dot_dimension_numbers<[1], [0], [0], [1], [0, 0, 1, 1], [], []>} : vector<8x128xf32>, vector<128x128xf32>, vector<8x128xf32> -> vector<8x128xf32>
    %c0_10 = arith.constant 0 : index
    %c0_11 = arith.constant 0 : index
    %c0_12 = arith.constant 0 : index
    %11 = vector.load %arg5[%c0_10, %c0_11, %c0_12] : memref<1x1x128xf32, #tpu.memory_space<vmem>>, vector<1x1x128xf32>
    %12 = vector.shape_cast %11 : vector<1x1x128xf32> to vector<1x128xf32>
    %13 = vector.broadcast %12 : vector<1x128xf32> to vector<8x128xf32>
    %14 = arith.addf %10, %13 : vector<8x128xf32>
    %cst_13 = arith.constant 0.000000e+00 : f32
    %15 = vector.broadcast %cst_13 : f32 to vector<8x128xf32>
    %16 = arith.maximumf %14, %15 : vector<8x128xf32>
    %c0_14 = arith.constant 0 : index
    %c0_15 = arith.constant 0 : index
    %17 = vector.load %arg6[%c0_14, %c0_15] : memref<128x4xf32, #tpu.memory_space<vmem>>, vector<128x4xf32>
    %cst_16 = arith.constant dense<0.000000e+00> : vector<8x4xf32>
    %18 = tpu.matmul %16, %17, %cst_16 {dimension_numbers = #tpu.dot_dimension_numbers<[1], [0], [0], [1], [0, 0, 1, 1], [], []>} : vector<8x128xf32>, vector<128x4xf32>, vector<8x4xf32> -> vector<8x4xf32>
    %c0_17 = arith.constant 0 : index
    %c0_18 = arith.constant 0 : index
    %19 = vector.load %arg7[%c0_17, %c0_18] : memref<1x4xf32, #tpu.memory_space<vmem>>, vector<1x4xf32>
    %20 = vector.broadcast %19 : vector<1x4xf32> to vector<8x4xf32>
    %21 = arith.addf %18, %20 : vector<8x4xf32>
    %c0_19 = arith.constant 0 : index
    %c0_20 = arith.constant 0 : index
    %22 = vector.load %arg8[%c0_19, %c0_20] : memref<8x4xf32, #tpu.memory_space<vmem>>, vector<8x4xf32>
    tpu.vector_store %arg8[%c0_19, %c0_20], %21 {strides = array<i32>} : memref<8x4xf32, #tpu.memory_space<vmem>>, vector<8x4xf32>,
    return
  }
  func.func @transform_0(%arg0: i32) -> (i32, i32) {
    %c0_i32 = arith.constant 0 : i32
    %c0_i32_0 = arith.constant 0 : i32
    return %arg0, %c0_i32 : i32, i32
  }
  func.func @transform_1(%arg0: i32) -> (i32, i32) {
    %c0_i32 = arith.constant 0 : i32
    %c0_i32_0 = arith.constant 0 : i32
    %c0_i32_1 = arith.constant 0 : i32
    return %c0_i32, %c0_i32_0 : i32, i32
  }
  func.func @transform_2(%arg0: i32) -> (i32, i32) {
    %c0_i32 = arith.constant 0 : i32
    %c0_i32_0 = arith.constant 0 : i32
    %c0_i32_1 = arith.constant 0 : i32
    return %c0_i32, %c0_i32_0 : i32, i32
  }
  func.func @transform_3(%arg0: i32) -> (i32, i32, i32) {
    %c0_i32 = arith.constant 0 : i32
    %c0_i32_0 = arith.constant 0 : i32
    %c0_i32_1 = arith.constant 0 : i32
    %c0_i32_2 = arith.constant 0 : i32
    return %c0_i32, %c0_i32_0, %c0_i32_1 : i32, i32, i32
  }
  func.func @transform_4(%arg0: i32) -> (i32, i32, i32) {
    %c0_i32 = arith.constant 0 : i32
    %c0_i32_0 = arith.constant 0 : i32
    %c0_i32_1 = arith.constant 0 : i32
    %c0_i32_2 = arith.constant 0 : i32
    return %c0_i32, %c0_i32_0, %c0_i32_1 : i32, i32, i32
  }
  func.func @transform_5(%arg0: i32) -> (i32, i32) {
    %c0_i32 = arith.constant 0 : i32
    %c0_i32_0 = arith.constant 0 : i32
    %c0_i32_1 = arith.constant 0 : i32
    return %c0_i32, %c0_i32_0 : i32, i32
  }
  func.func @transform_6(%arg0: i32) -> (i32, i32) {
    %c0_i32 = arith.constant 0 : i32
    %c0_i32_0 = arith.constant 0 : i32
    %c0_i32_1 = arith.constant 0 : i32
    return %c0_i32, %c0_i32_0 : i32, i32
  }
  func.func @transform_7(%arg0: i32) -> (i32, i32) {
    %c0_i32 = arith.constant 0 : i32
    %c0_i32_0 = arith.constant 0 : i32
    return %arg0, %c0_i32 : i32, i32
  }
}

</mosaic_0001>

<llo_original>
// kernel: mlp_forward.1
$region0: #{mlp_forward.1}
  #allocation0 [shape = 'u32[]', space=smem, size = 0x4, offset = 0x4, fixed_abs, tag = 'smem constant byte address 0x4 - core index']
  #allocation1 [shape = 'u32[72,128]{1,0:T(1,128)}', space=vmem, size = 0x9000, scoped, tag = 'internal scratch']
  %s0 = inlined_call_operand.vmem [shape: f32[8,8], index: 0, kind: input, shape index: {}]
  %s1 = inlined_call_operand.vmem [shape: f32[8,128], index: 1, kind: input, shape index: {}]
  %s2 = inlined_call_operand.vmem [shape: f32[1,128], index: 2, kind: input, shape index: {}]
  %s3 = inlined_call_operand.vmem [shape: f32[1,128,128], index: 3, kind: input, shape index: {}]
  %s4 = inlined_call_operand.vmem [shape: f32[1,1,128], index: 4, kind: input, shape index: {}]
  %s5 = inlined_call_operand.vmem [shape: f32[128,4], index: 5, kind: input, shape index: {}]
  %s6 = inlined_call_operand.vmem [shape: f32[1,4], index: 6, kind: input, shape index: {}]
  %s7 = inlined_call_operand.vmem [shape: f32[8,4], index: 7, kind: output, shape index: {}]
  %s8 = sld [smem:[#allocation0]]
  $region38: #{mlp_forward.1} parent=0
    _
  %s10 = ssub.s32 1, %s8
  %s11 = scalar_select 0, %s10, %s8
  // Predicated region
  $region2: #{mlp_forward.1} parent=0 // pred_check
    _
  $region3: #{mlp_forward.1} parent=0 // pred_check_branch
    %13 = sbr.rel (0) target = $region5
  $region4: #{mlp_forward.1} parent=0 // pred_region
    _
  $region5: #{mlp_forward.1} parent=0 // pred_fallthru
    _
  // Predicated region
  $region6: #{mlp_forward.1} parent=0 // pred_check
    _
  $region7: #{mlp_forward.1} parent=0 // pred_check_branch
    %15 = sbr.rel (0) target = $region9
  $region8: #{mlp_forward.1} parent=0 // pred_region
    _
  $region9: #{mlp_forward.1} parent=0 // pred_fallthru
    _
  // Predicated region
  $region10: #{mlp_forward.1} parent=0 // pred_check
    _
  $region11: #{mlp_forward.1} parent=0 // pred_check_branch
    %17 = sbr.rel (0) target = $region13
  $region12: #{mlp_forward.1} parent=0 // pred_region
    _
  $region13: #{mlp_forward.1} parent=0 // pred_fallthru
    _
  // Predicated region
  $region14: #{mlp_forward.1} parent=0 // pred_check
    _
  $region15: #{mlp_forward.1} parent=0 // pred_check_branch
    %19 = sbr.rel (0) target = $region17
  $region16: #{mlp_forward.1} parent=0 // pred_region
    _
  $region17: #{mlp_forward.1} parent=0 // pred_fallthru
    _
  // Predicated region
  $region18: #{mlp_forward.1} parent=0 // pred_check
    _
  $region19: #{mlp_forward.1} parent=0 // pred_check_branch
    %21 = sbr.rel (0) target = $region21
  $region20: #{mlp_forward.1} parent=0 // pred_region
    _
  $region21: #{mlp_forward.1} parent=0 // pred_fallthru
    _
  // Predicated region
  $region22: #{mlp_forward.1} parent=0 // pred_check
    _
  $region23: #{mlp_forward.1} parent=0 // pred_check_branch
    %23 = sbr.rel (0) target = $region25
  $region24: #{mlp_forward.1} parent=0 // pred_region
    _
  $region25: #{mlp_forward.1} parent=0 // pred_fallthru
    _
  // Predicated region
  $region26: #{mlp_forward.1} parent=0 // pred_check
    _
  $region27: #{mlp_forward.1} parent=0 // pred_check_branch
    %25 = sbr.rel (0) target = $region29
  $region28: #{mlp_forward.1} parent=0 // pred_region
    _
  $region29: #{mlp_forward.1} parent=0 // pred_fallthru
    _
  %v26 = vld [vmem:[%s0] sm:$0xff]
  %v27 = vld [vmem:[%s1] sm:$0xff]
  %v28 = vld [vmem:[%s2] sm:$0x1]
  %v30 = vperm.slane %v28, 0
  %vm32 = vcmask 64512
  %v34 = vsel %vm32, %v26, 0
  %36 = vmatpush.msra.mxu0 0.0
  %37 = vmatpush.msra.mxu0 0.0
  %38 = vmatpush.msra.mxu0 0.0
  %39 = vmatpush.msra.mxu0 0.0
  %40 = vmatpush.msra.mxu0 0.0
  %41 = vmatpush.msra.mxu0 0.0
  %42 = vmatpush.msra.mxu0 0.0
  %43 = vmatpush.msra.mxu0 0.0
  %44 = vmatpush.msra.mxu0 0.0
  %45 = vmatpush.msra.mxu0 0.0
  %46 = vmatpush.msra.mxu0 0.0
  %47 = vmatpush.msra.mxu0 0.0
  %48 = vmatpush.msra.mxu0 0.0
  %49 = vmatpush.msra.mxu0 0.0
  %50 = vmatpush.msra.mxu0 0.0
  %51 = vmatpush.msra.mxu0 %v27
  %52 = vmatmul.f32.gmra.mxu0 %v34
  %v53 = vpop.f32.mrf.mxu0
  %v54 = vadd.f32 %v30, %v53
  %55 = vdwg.mxu0
  %v56 = vmax.f32 %v54, 0.0
  %v57 = vld [vmem:[%s3] sm:$0xff]
  %v58 = vld [vmem:[%s3 + $0x8] sm:$0xff]
  %v59 = vld [vmem:[%s3 + $0x10] sm:$0xff]
  %v60 = vld [vmem:[%s3 + $0x18] sm:$0xff]
  %v61 = vld [vmem:[%s3 + $0x20] sm:$0xff]
  %v62 = vld [vmem:[%s3 + $0x28] sm:$0xff]
  %v63 = vld [vmem:[%s3 + $0x30] sm:$0xff]
  %v64 = vld [vmem:[%s3 + $0x38] sm:$0xff]
  %v65 = vld [vmem:[%s3 + $0x40] sm:$0xff]
  %v66 = vld [vmem:[%s3 + $0x48] sm:$0xff]
  %v67 = vld [vmem:[%s3 + $0x50] sm:$0xff]
  %v68 = vld [vmem:[%s3 + $0x58] sm:$0xff]
  %v69 = vld [vmem:[%s3 + $0x60] sm:$0xff]
  %v70 = vld [vmem:[%s3 + $0x68] sm:$0xff]
  %v71 = vld [vmem:[%s3 + $0x70] sm:$0xff]
  %v72 = vld [vmem:[%s3 + $0x78] sm:$0xff]
  %v73 = vld [vmem:[%s4] sm:$0x1]
  %v75 = vperm.slane %v73, 0
  %77 = vmatpush.msra.mxu0 %v72
  %78 = vmatpush.msra.mxu0 %v71
  %79 = vmatpush.msra.mxu0 %v70
  %80 = vmatpush.msra.mxu0 %v69
  %81 = vmatpush.msra.mxu0 %v68
  %82 = vmatpush.msra.mxu0 %v67
  %83 = vmatpush.msra.mxu0 %v66
  %84 = vmatpush.msra.mxu0 %v65
  %85 = vmatpush.msra.mxu0 %v64
  %86 = vmatpush.msra.mxu0 %v63
  %87 = vmatpush.msra.mxu0 %v62
  %88 = vmatpush.msra.mxu0 %v61
  %89 = vmatpush.msra.mxu0 %v60
  %90 = vmatpush.msra.mxu0 %v59
  %91 = vmatpush.msra.mxu0 %v58
  %92 = vmatpush.msra.mxu0 %v57
  %93 = vmatmul.f32.gmra.mxu0 %v56
  %v94 = vpop.f32.mrf.mxu0
  %v95 = vadd.f32 %v75, %v94
  %96 = vdwg.mxu0
  %v97 = vmax.f32 %v95, 0.0
  %v98 = vld [vmem:[%s5] sm:$0xff]
  %v99 = vld [vmem:[%s5 + $0x8] sm:$0xff]
  %v100 = vld [vmem:[%s5 + $0x10] sm:$0xff]
  %v101 = vld [vmem:[%s5 + $0x18] sm:$0xff]
  %v102 = vld [vmem:[%s5 + $0x20] sm:$0xff]
  %v103 = vld [vmem:[%s5 + $0x28] sm:$0xff]
  %v104 = vld [vmem:[%s5 + $0x30] sm:$0xff]
  %v105 = vld [vmem:[%s5 + $0x38] sm:$0xff]
  %v106 = vld [vmem:[%s5 + $0x40] sm:$0xff]
  %v107 = vld [vmem:[%s5 + $0x48] sm:$0xff]
  %v108 = vld [vmem:[%s5 + $0x50] sm:$0xff]
  %v109 = vld [vmem:[%s5 + $0x58] sm:$0xff]
  %v110 = vld [vmem:[%s5 + $0x60] sm:$0xff]
  %v111 = vld [vmem:[%s5 + $0x68] sm:$0xff]
  %v112 = vld [vmem:[%s5 + $0x70] sm:$0xff]
  %v113 = vld [vmem:[%s5 + $0x78] sm:$0xff]
  %v114 = vld [vmem:[%s6] sm:$0x1]
  %v116 = vperm.slane %v114, 0
  %118 = vmatpush.msra.mxu0 %v113
  %119 = vmatpush.msra.mxu0 %v112
  %120 = vmatpush.msra.mxu0 %v111
  %121 = vmatpush.msra.mxu0 %v110
  %122 = vmatpush.msra.mxu0 %v109
  %123 = vmatpush.msra.mxu0 %v108
  %124 = vmatpush.msra.mxu0 %v107
  %125 = vmatpush.msra.mxu0 %v106
  %126 = vmatpush.msra.mxu0 %v105
  %127 = vmatpush.msra.mxu0 %v104
  %128 = vmatpush.msra.mxu0 %v103
  %129 = vmatpush.msra.mxu0 %v102
  %130 = vmatpush.msra.mxu0 %v101
  %131 = vmatpush.msra.mxu0 %v100
  %132 = vmatpush.msra.mxu0 %v99
  %133 = vmatpush.msra.mxu0 %v98
  %134 = vmatmul.f32.gmra.mxu0 %v97
  %v135 = vpop.f32.mrf.mxu0
  %v136 = vadd.f32 %v116, %v135
  %137 = vdwg.mxu0
  %vm138 = vcmask 31744
  %139 = vst.msk [vmem:[%s7] sm:$0xff] %vm138, %v136
  // Predicated region
  $region30: #{mlp_forward.1} parent=0 // pred_check
    _
  $region31: #{mlp_forward.1} parent=0 // pred_check_branch
    %141 = sbr.rel (0) target = $region33
  $region32: #{mlp_forward.1} parent=0 // pred_region
    _
  $region33: #{mlp_forward.1} parent=0 // pred_fallthru
    _
  // Predicated region
  $region34: #{mlp_forward.1} parent=0 // pred_check
    _
  $region35: #{mlp_forward.1} parent=0 // pred_check_branch
    %143 = sbr.rel (0) target = $region37
  $region36: #{mlp_forward.1} parent=0 // pred_region
    _
  $region37: #{mlp_forward.1} parent=0 // pred_fallthru
    _

</llo_original>
